<compile_context>
chip_gen: v6e
topology: v6e:2x2x1
jax: 0.10.0
libtpu: 0.0.40
codegen_flags: <defaults>
</compile_context>

<pallas_src>
import jax
import jax.numpy as jnp
from jax.experimental import pallas as pl
from jax.experimental.pallas import tpu as pltpu


def _round_up(x, m):
    return ((x + m - 1) // m) * m


# --------------------------------------------------------------------------
# Kernels
# --------------------------------------------------------------------------

def _embed_block_kernel(rows_ref, table_ref, out_ref):
    """Resident-table path: one-hot x table matmul on the MXU.

    rows_ref : (TB, 1) int32  -- effective row ids (CFG dropout already fused)
    table_ref: (V, H)         -- full embedding table, resident in VMEM
    out_ref  : (TB, H)
    """
    tb = out_ref.shape[0]
    v = table_ref.shape[0]
    rows = rows_ref[...]                                       # (TB, 1)
    col = jax.lax.broadcasted_iota(jnp.int32, (tb, v), 1)      # (TB, V)
    onehot = (col == rows).astype(table_ref.dtype)             # (TB, V)
    out_ref[...] = jnp.dot(
        onehot, table_ref[...], preferred_element_type=jnp.float32
    ).astype(out_ref.dtype)


def _gather_row_kernel(rows_smem, row_ref, out_ref):
    """Large-table fallback: per-row gather driven by scalar-prefetched ids.

    rows_smem: (B_pad,) int32 in SMEM -- consumed by the index_map
    row_ref  : (1, 1, H)  -- the selected table row
    out_ref  : (1, 1, H)
    """
    del rows_smem
    out_ref[...] = row_ref[...]


# --------------------------------------------------------------------------
# Wrapper (PyTorch LabelEmbedder.forward semantics)
# --------------------------------------------------------------------------

def label_embedder_forward(labels, table, *, num_classes, dropout_prob,
                           train, force_drop_ids=None, rng=None,
                           force_gather=False):
    """Pallas equivalent of LabelEmbedder.forward."""
    B = labels.shape[0]
    V, H = table.shape
    labels = labels.astype(jnp.int32)

    # ---- label dropout (tiny scalar glue, stays in JAX) -------------------
    use_dropout = dropout_prob > 0
    dropping = (train and use_dropout) or (force_drop_ids is not None)
    if dropping:
        assert V >= num_classes + 1, (
            "token_drop selects row num_classes; embedding table has no CFG row")
        if force_drop_ids is not None:
            drop = force_drop_ids == 1
        else:
            assert rng is not None, (
                "train=True with dropout_prob>0 and no force_drop_ids requires rng")
            drop = jax.random.uniform(rng, (B,)) < dropout_prob
        eff_rows = jnp.where(drop, num_classes, labels).astype(jnp.int32)
    else:
        eff_rows = labels

    itemsize = jnp.dtype(table.dtype).itemsize

    # ---- lane-dense output: pad H to a multiple of 128 if a config isn't ---
    H_pad = _round_up(H, 128)
    if H_pad != H:
        table = jnp.pad(table, ((0, 0), (0, H_pad - H)))

    # ---- batch blocking: sublane-dense blocks, >=2 blocks when batch allows
    sublane = {1: 32, 2: 16}.get(itemsize, 8)   # packing of the output dtype
    TB_CAP = 512                                # amortize ~600-cycle grid-step cost
    B_round = _round_up(B, sublane)
    if B_round <= sublane:
        TB = B_round                            # tiny batch: single block
    elif B_round <= 2 * TB_CAP:
        # two blocks so v7x can shard the batch across its two TensorCores
        TB = _round_up(pl.cdiv(B_round, 2), sublane)
    else:
        TB = TB_CAP
    B_pad = _round_up(B_round, TB)
    num_blocks = B_pad // TB

    # ---- VMEM budget (table double-buffered by Pallas default) ------------
    vmem_needed = (
        2 * V * H_pad * itemsize        # resident table (double-buffered input)
        + 2 * TB * H_pad * itemsize     # output tile, double-buffered
        + 2 * TB * 4                    # row-id tile, double-buffered
        + TB * V * 4                    # broadcasted_iota temp (int32)
        + TB * V * itemsize             # one-hot temp
        + (2 << 20)                     # layout / spill slack
    )
    try:  # generation-aware capacity: 128 MiB on v5e/v6e, 64 MiB per TC on v7x
        vmem_phys = pltpu.get_tpu_info().vmem_capacity_bytes
    except Exception:
        vmem_phys = 64 << 20            # conservative (v7x) fallback
    vmem_cap = max(vmem_phys - (8 << 20), 32 << 20)

    use_gather = force_gather or (vmem_needed > vmem_cap)

    if not use_gather:
        # ---------- resident-table one-hot MXU gather (typical small V) ----
        if B_pad == B:
            rows_p = eff_rows.reshape(B, 1)      # no pad/slice HBM round trip
        else:
            rows_p = jnp.zeros((B_pad,), jnp.int32).at[:B].set(eff_rows)
            rows_p = rows_p.reshape(B_pad, 1)

        cost = pl.CostEstimate(
            flops=2 * B_pad * V * H_pad,
            transcendentals=0,
            bytes_accessed=(V * H_pad * itemsize
                            + B_pad * H_pad * itemsize + B_pad * 4),
        )
        vmem_limit = None
        if vmem_needed > (16 << 20):    # v5e's default scoped limit is 16 MiB
            vmem_limit = min(vmem_needed, vmem_cap)

        out = pl.pallas_call(
            _embed_block_kernel,
            out_shape=jax.ShapeDtypeStruct((B_pad, H_pad), table.dtype),
            grid_spec=pltpu.PrefetchScalarGridSpec(
                num_scalar_prefetch=0,
                grid=(num_blocks,),
                in_specs=[
                    pl.BlockSpec((TB, 1), lambda i: (i, 0)),      # row ids
                    pl.BlockSpec((V, H_pad), lambda i: (0, 0)),   # resident table
                ],
                out_specs=pl.BlockSpec((TB, H_pad), lambda i: (i, 0)),
            ),
            compiler_params=pltpu.CompilerParams(
                dimension_semantics=("parallel",),   # batch blocks -> v7x 2 TCs
                vmem_limit_bytes=vmem_limit),
            cost_estimate=cost,
        )(rows_p, table)

        if B_pad != B:
            out = out[:B]
    else:
        # ---------- large-V fallback: scalar-prefetched per-row gather -----
        # HBM traffic B_pad*H instead of V*H; VMEM footprint O(H).
        if B_pad == B:
            rows_p = eff_rows
        else:
            rows_p = jnp.zeros((B_pad,), jnp.int32).at[:B].set(eff_rows)

        table3 = table.reshape(V, 1, H_pad)   # unit dim keeps blocks full on last 2 dims

        cost = pl.CostEstimate(
            flops=0, transcendentals=0,
            bytes_accessed=2 * B_pad * H_pad * itemsize + B_pad * 4)

        out3 = pl.pallas_call(
            _gather_row_kernel,
            out_shape=jax.ShapeDtypeStruct((B_pad, 1, H_pad), table.dtype),
            grid_spec=pltpu.PrefetchScalarGridSpec(
                num_scalar_prefetch=1,
                grid=(B_pad,),
                in_specs=[
                    # data-dependent row index from the scalar-prefetched ids
                    pl.BlockSpec((1, 1, H_pad), lambda i, rows: (rows[i], 0, 0)),
                ],
                out_specs=pl.BlockSpec((1, 1, H_pad), lambda i, rows: (i, 0, 0)),
            ),
            compiler_params=pltpu.CompilerParams(
                dimension_semantics=("arbitrary",)),
            cost_estimate=cost,
        )(rows_p, table3)

        out = out3.reshape(B_pad, H_pad)
        if B_pad != B:
            out = out[:B]

    if H_pad != H:
        out = out[:, :H]
    return out


if __name__ == "__main__":
    num_classes = 10
    hidden_size = 128          # lane-dense (multiple of 128)
    dropout_prob = 0.1
    batch = 8

    key = jax.random.PRNGKey(0)
    k_table, k_labels, k_drop = jax.random.split(key, 3)

    # nn.Embedding default init: N(0, 1). Extra row for the CFG "null" class.
    use_cfg_embedding = 1 if dropout_prob > 0 else 0
    table = jax.random.normal(
        k_table, (num_classes + use_cfg_embedding, hidden_size), dtype=jnp.float32)

    labels = jax.random.randint(k_labels, (batch,), 0, num_classes, dtype=jnp.int32)
    force_drop_ids = jnp.array([0, 1, 0, 0, 1, 0, 0, 0], dtype=jnp.int32)

    # --- run 1: eval mode, no dropout ---
    out_eval = label_embedder_forward(
        labels, table, num_classes=num_classes, dropout_prob=dropout_prob,
        train=False)
    jax.block_until_ready(out_eval)
    ref_eval = jnp.take(table, labels, axis=0)
    assert jnp.allclose(out_eval, ref_eval, atol=1e-6), "eval-mode mismatch"

    # --- run 2: forced drop ids (deterministic CFG dropout) ---
    out_drop = label_embedder_forward(
        labels, table, num_classes=num_classes, dropout_prob=dropout_prob,
        train=True, force_drop_ids=force_drop_ids)
    jax.block_until_ready(out_drop)
    eff_labels = jnp.where(force_drop_ids == 1, num_classes, labels)
    ref_drop = jnp.take(table, eff_labels, axis=0)
    assert jnp.allclose(out_drop, ref_drop, atol=1e-6), "forced-drop mismatch"

    # --- run 3: train mode with random dropout (deterministic given key) ---
    out_train = label_embedder_forward(
        labels, table, num_classes=num_classes, dropout_prob=dropout_prob,
        train=True, rng=k_drop)
    jax.block_until_ready(out_train)
    drop = jax.random.uniform(k_drop, (batch,)) < dropout_prob
    ref_train = jnp.take(table, jnp.where(drop, num_classes, labels), axis=0)
    assert jnp.allclose(out_train, ref_train, atol=1e-6), "train-mode mismatch"

    # --- run 4: force the large-V scalar-prefetch gather fallback path ---
    out_gather = label_embedder_forward(
        labels, table, num_classes=num_classes, dropout_prob=dropout_prob,
        train=True, force_drop_ids=force_drop_ids, force_gather=True)
    jax.block_until_ready(out_gather)
    assert jnp.allclose(out_gather, ref_drop, atol=1e-6), "gather-path mismatch"

    print("KERNEL_OK")
</pallas_src>

<mosaic_0001>
module attributes {stable_mosaic.version = 11 : i64} {
  func.func @_embed_block_kernel(%arg0: i32, %arg1: memref<8x1xi32, #tpu.memory_space<vmem>>, %arg2: memref<11x128xf32, #tpu.memory_space<vmem>>, %arg3: memref<8x128xf32, #tpu.memory_space<vmem>>) attributes {dimension_semantics = [#tpu.dimension_semantics<parallel>], iteration_bounds = array<i64: 1>, scalar_prefetch = 0 : i64, scratch_operands = 0 : i64, tpu.core_type = #tpu.core_type<tc>, window_params = [{transform_indices = @transform_0, window_bounds = array<i64: 8, 1>}, {pipeline_mode = #tpu.pipeline_mode<synchronous>, transform_indices = @transform_1, window_bounds = array<i64: 11, 128>}, {transform_indices = @transform_2, window_bounds = array<i64: 8, 128>}]} {
    %c0 = arith.constant 0 : index
    %c0_0 = arith.constant 0 : index
    %0 = vector.load %arg1[%c0, %c0_0] : memref<8x1xi32, #tpu.memory_space<vmem>>, vector<8x1xi32>
    %1 = tpu.iota {dimensions = array<i32: 1>} : vector<8x11xi32>
    %2 = vector.broadcast %0 : vector<8x1xi32> to vector<8x11xi32>
    %3 = arith.cmpi eq, %1, %2 : vector<8x11xi32>
    %4 = arith.extui %3 : vector<8x11xi1> to vector<8x11xi32>
    %5 = arith.sitofp %4 : vector<8x11xi32> to vector<8x11xf32>
    %c0_1 = arith.constant 0 : index
    %c0_2 = arith.constant 0 : index
    %6 = vector.load %arg2[%c0_1, %c0_2] : memref<11x128xf32, #tpu.memory_space<vmem>>, vector<11x128xf32>
    %cst = arith.constant dense<0.000000e+00> : vector<8x128xf32>
    %7 = tpu.matmul %5, %6, %cst {dimension_numbers = #tpu.dot_dimension_numbers<[1], [0], [0], [1], [0, 0, 1, 1], [], []>} : vector<8x11xf32>, vector<11x128xf32>, vector<8x128xf32> -> vector<8x128xf32>
    %c0_3 = arith.constant 0 : index
    %c0_4 = arith.constant 0 : index
    %8 = vector.load %arg3[%c0_3, %c0_4] : memref<8x128xf32, #tpu.memory_space<vmem>>, vector<8x128xf32>
    tpu.vector_store %arg3[%c0_3, %c0_4], %7 {strides = array<i32>} : memref<8x128xf32, #tpu.memory_space<vmem>>, vector<8x128xf32>,
    return
  }
  func.func @transform_0(%arg0: i32) -> (i32, i32) {
    %c0_i32 = arith.constant 0 : i32
    %c0_i32_0 = arith.constant 0 : i32
    return %arg0, %c0_i32 : i32, i32
  }
  func.func @transform_1(%arg0: i32) -> (i32, i32) {
    %c0_i32 = arith.constant 0 : i32
    %c0_i32_0 = arith.constant 0 : i32
    %c0_i32_1 = arith.constant 0 : i32
    return %c0_i32, %c0_i32_0 : i32, i32
  }
  func.func @transform_2(%arg0: i32) -> (i32, i32) {
    %c0_i32 = arith.constant 0 : i32
    %c0_i32_0 = arith.constant 0 : i32
    return %arg0, %c0_i32 : i32, i32
  }
}

</mosaic_0001>

<llo_original>
// kernel: tpu_custom_call.1
$region0: #{tpu_custom_call.1}
  #allocation0 [shape = 'u32[]', space=smem, size = 0x4, offset = 0x4, fixed_abs, tag = 'smem constant byte address 0x4 - core index']
  #allocation1 [shape = 'u32[144,128]{1,0:T(1,128)}', space=vmem, size = 0x12000, scoped, tag = 'internal scratch']
  %s0 = inlined_call_operand.vmem [shape: s32[8,1], index: 0, kind: input, shape index: {}]
  %s1 = inlined_call_operand.hbm [shape: f32[11,128], index: 1, kind: input, shape index: {}]
  %s2 = inlined_call_operand.hbm [shape: f32[8,128], index: 2, kind: output, shape index: {}]
  %s3 = sld [smem:[#allocation0]]
  $region22: #{tpu_custom_call.1} parent=0
    _
  %s5 = ssub.s32 1, %s3
  %s6 = scalar_select 0, %s5, %s3
  $region1: #{tpu_custom_call.1} parent=0
    #allocation2 [shape = 'u8[8192]{0}', space=vmem, size = 0x2000, scoped, tag = 'input window, operand 1, single buffered']
    #allocation3 [shape = 's32[1]{0}', space=sflag, size = 0x4, scoped, tag = 'scoped memory for tpu_custom_call.1']
    #allocation4 [shape = 's32[1]{0}', space=sflag, size = 0x4, scoped, tag = 'scoped memory for tpu_custom_call.1']
    #allocation5 [shape = 'u8[4096]{0}', space=vmem, size = 0x1000, scoped, tag = 'output window, operand 0, single buffered']
    %7 = vsyncpa [#allocation3], 0
    %8 = vsyncpa [#allocation4], 0
    // Predicated region
    $region2: #{tpu_custom_call.1} parent=1 // pred_check
      _
    $region3: #{tpu_custom_call.1} parent=1 // pred_check_branch
      %10 = sbr.rel (0) target = $region5
    $region4: #{tpu_custom_call.1} parent=1 // pred_region
      _
    $region5: #{tpu_custom_call.1} parent=1 // pred_fallthru
      _
    // Predicated region
    $region6: #{tpu_custom_call.1} parent=1 // pred_check
      _
    $region7: #{tpu_custom_call.1} parent=1 // pred_check_branch
      %12 = sbr.rel (0) target = $region9
    $region8: #{tpu_custom_call.1} parent=1 // pred_region
      %s14 = ssub.s32 256, 256
      %15 = vsyncadd [#allocation3], %s14
      %s16 = sshll.u32 [#allocation2], 4
      %s17 = int_to_ptr.vmem [resolvable:$true] %s16
      %22 = dma.hbm_to_vmem [thread:$0]  %s1, 256, %s17, [#allocation3], 128, 128, 8
    $region9: #{tpu_custom_call.1} parent=1 // pred_fallthru
      _
    // Predicated region
    $region10: #{tpu_custom_call.1} parent=1 // pred_check
      _
    $region11: #{tpu_custom_call.1} parent=1 // pred_check_branch
      %24 = sbr.rel (0) target = $region13
    $region12: #{tpu_custom_call.1} parent=1 // pred_region
      %25 = dma.done [#allocation3], 256
    $region13: #{tpu_custom_call.1} parent=1 // pred_fallthru
      _
    %v26 = vld [vmem:[%s0] sm:$0xff]
    %v27 = vlaneseq
    %v28 = vand.u32 %v27, 127
    %29 = vset.pattern.permute.xlu0 0
    %30 = vperm.xlu0 %29, %v26
    %v31 = vpop.permute.xlu0 %30
    %vm32 = vcmp.eq.s32.totalorder %v28, %v31
    %v33 = vsel %vm32, 1, 0
    %v34 = vcvt.s32.f32 %v33
    %v35 = vld [vmem:[#allocation2] sm:$0xff]
    %v36 = vld [vmem:[#allocation2 + $0x8] sm:$0x7]
    %vm37 = vcmask 89088
    %v39 = vsel %vm37, %v34, 0
    %vm41 = vcmask 1042432
    %v43 = vsel %vm41, %v36, 0
    %45 = vmatprep.subr.mxu0 0.0
    %46 = vmatpush1.msra.mxu0 0.0
    %47 = vmatprep.subr.mxu0 0.0
    %48 = vmatpush1.msra.mxu0 0.0
    %49 = vmatprep.subr.mxu0 0.0
    %50 = vmatpush1.msra.mxu0 0.0
    %51 = vmatprep.subr.mxu0 0.0
    %52 = vmatpush1.msra.mxu0 0.0
    %53 = vmatprep.subr.mxu0 0.0
    %54 = vmatpush1.msra.mxu0 0.0
    %55 = vmatprep.subr.mxu0 0.0
    %56 = vmatpush1.msra.mxu0 0.0
    %57 = vmatprep.subr.mxu0 0.0
    %58 = vmatpush1.msra.mxu0 0.0
    %59 = vmatprep.subr.mxu0 0.0
    %60 = vmatpush1.msra.mxu0 0.0
    %61 = vmatprep.subr.mxu0 0.0
    %62 = vmatpush1.msra.mxu0 0.0
    %63 = vmatprep.subr.mxu0 0.0
    %64 = vmatpush1.msra.mxu0 0.0
    %65 = vmatprep.subr.mxu0 0.0
    %66 = vmatpush1.msra.mxu0 0.0
    %67 = vmatprep.subr.mxu0 0.0
    %68 = vmatpush1.msra.mxu0 0.0
    %69 = vmatprep.subr.mxu0 0.0
    %70 = vmatpush1.msra.mxu0 0.0
    %71 = vmatprep.subr.mxu0 0.0
    %72 = vmatpush1.msra.mxu0 0.0
    %73 = vmatprep.subr.mxu0 0.0
    %74 = vmatpush1.msra.mxu0 %v43
    %75 = vmatprep.subr.mxu0 0.0
    %76 = vmatpush1.msra.mxu0 %v35
    %77 = vmatprep.subr.mxu0 0.0
    %78 = vmatpush2.msra.mxu0 0.0
    %79 = vmatprep.subr.mxu0 0.0
    %80 = vmatpush2.msra.mxu0 0.0
    %81 = vmatprep.subr.mxu0 0.0
    %82 = vmatpush2.msra.mxu0 0.0
    %83 = vmatprep.subr.mxu0 0.0
    %84 = vmatpush2.msra.mxu0 0.0
    %85 = vmatprep.subr.mxu0 0.0
    %86 = vmatpush2.msra.mxu0 0.0
    %87 = vmatprep.subr.mxu0 0.0
    %88 = vmatpush2.msra.mxu0 0.0
    %89 = vmatprep.subr.mxu0 0.0
    %90 = vmatpush2.msra.mxu0 0.0
    %91 = vmatprep.subr.mxu0 0.0
    %92 = vmatpush2.msra.mxu0 0.0
    %93 = vmatprep.subr.mxu0 0.0
    %94 = vmatpush2.msra.mxu0 0.0
    %95 = vmatprep.subr.mxu0 0.0
    %96 = vmatpush2.msra.mxu0 0.0
    %97 = vmatprep.subr.mxu0 0.0
    %98 = vmatpush2.msra.mxu0 0.0
    %99 = vmatprep.subr.mxu0 0.0
    %100 = vmatpush2.msra.mxu0 0.0
    %101 = vmatprep.subr.mxu0 0.0
    %102 = vmatpush2.msra.mxu0 0.0
    %103 = vmatprep.subr.mxu0 0.0
    %104 = vmatpush2.msra.mxu0 0.0
    %105 = vmatprep.subr.mxu0 0.0
    %106 = vmatpush2.msra.mxu0 0.0
    %107 = vmatprep.subr.mxu0 0.0
    %108 = vmatpush2.msra.mxu0 0.0
    %109 = vmatprep.mubr.f32.mxu0 0.0
    %110 = vmatmul.mubr.f32.gmra.mxu0 %v39
    %v111 = vpop.f32.mrf.mxu0
    %v112 = vadd.f32 0.0, %v111
    %v113 = vpop.f32.mrf.mxu0
    %114 = vdwg.mxu0
    %115 = vst [vmem:[#allocation5] sm:$0xff] %v112
    // Predicated region
    $region14: #{tpu_custom_call.1} parent=1 // pred_check
      _
    $region15: #{tpu_custom_call.1} parent=1 // pred_check_branch
      %117 = sbr.rel (0) target = $region17
    $region16: #{tpu_custom_call.1} parent=1 // pred_region
      %s119 = ssub.s32 128, 128
      %120 = vsyncadd [#allocation4], %s119
      %s122 = sshll.u32 [#allocation5], 4
      %s123 = int_to_ptr.vmem [resolvable:$true] %s122
      %125 = dma.vmem_to_hbm [thread:$0]  %s123, 128, %s2, [#allocation4]
    $region17: #{tpu_custom_call.1} parent=1 // pred_fallthru
      _
    // Predicated region
    $region18: #{tpu_custom_call.1} parent=1 // pred_check
      _
    $region19: #{tpu_custom_call.1} parent=1 // pred_check_branch
      %127 = sbr.rel (0) target = $region21
    $region20: #{tpu_custom_call.1} parent=1 // pred_region
      %128 = dma.done [#allocation4], 128
    $region21: #{tpu_custom_call.1} parent=1 // pred_fallthru
      _
    %129 = vsyncpa [#allocation3], 1
    %130 = vsyncpa [#allocation4], 1

</llo_original>
